<compile_context>
chip_gen: v7x
topology: tpu7x:2x2x1
jax: 0.10.0
libtpu: 0.0.40
codegen_flags: <defaults>
</compile_context>

<pallas_src>
import jax
import jax.numpy as jnp
from jax.experimental import pallas as pl
from jax.experimental.pallas import tpu as pltpu

N_INPUT = 36
N_HIDDEN = 32
BN_EPS = 1e-5


def _mlp_kernel(x_ref, w1_ref, b1_ref, w2_ref, b2_ref, w3t_ref, b3_ref, o_ref):
    # x tile: [bt, F] (bf16 or f32); matmuls accumulate in f32.
    x = x_ref[...]

    # fc1 (BatchNorm folded into w1/b1) + ReLU
    h = jnp.dot(x, w1_ref[...], preferred_element_type=jnp.float32) + b1_ref[...]
    h = jnp.maximum(h, 0.0)

    # fc2 + ReLU
    h = jnp.dot(h, w2_ref[...], preferred_element_type=jnp.float32) + b2_ref[...]
    h = jnp.maximum(h, 0.0)

    # fc3 (out width 1): VPU broadcast-multiply + lane reduce, then a tiny
    # (bt,1)->(1,bt) XLU relayout so the store is lane-dense (unmasked vst).
    z = jnp.sum(h * w3t_ref[...], axis=-1, keepdims=True)       # [bt, 1]
    z = jnp.transpose(z) + b3_ref[...]                           # [1, bt]
    o_ref[...] = jax.nn.sigmoid(z).astype(o_ref.dtype)


def neuron_forward(x, params, *, block_b=16384, stream_dtype=jnp.bfloat16):
    """x: [B, N_INPUT] -> [B, 1] float32 (training-mode BatchNorm semantics)."""
    gamma, beta, w1, b1, w2, b2, w3, b3 = params
    B, F = x.shape

    # --- Single-pass batch stats (sum / sum-of-squares, f32) ----------------
    xf = x.astype(jnp.float32)
    n = jnp.asarray(B, jnp.float32)
    s1 = jnp.sum(xf, axis=0, keepdims=True)            # [1, F]
    s2 = jnp.sum(xf * xf, axis=0, keepdims=True)       # [1, F]
    mean = s1 / n
    var = jnp.maximum(s2 / n - jnp.square(mean), 0.0)   # biased var; clamp cancellation

    # --- Fold BatchNorm into fc1 ---------------------------------------------
    scale = gamma * jax.lax.rsqrt(var + BN_EPS)          # [1, F]
    shift = beta - mean * scale                          # [1, F]
    w1f = w1 * scale.T                                   # [F, H]
    b1f = b1 + shift @ w1                                # [1, H]
    w3t = w3.T                                           # [1, H]

    # --- Batch tiling --------------------------------------------------------
    block_b = max(128, min(int(block_b), 32768))         # VMEM-safe tile ceiling
    if B >= 4 * 128:
        # keep >=4 tiles when the batch allows it so both v7x TCs get work
        block_b = min(block_b, max(128, (B // 4) // 128 * 128))
    bt = min(block_b, B)
    if bt < B:
        bt = max(128, (bt // 128) * 128)    # lane-aligned tiles (multiple of 128)
        num_tiles = pl.cdiv(B, bt)          # ragged tail handled by Pallas edge block
    else:
        bt = B                              # single full-array tile, no padding needed
        num_tiles = 1
    b_total = num_tiles * bt

    # bf16 streaming: cast fuses with the stats reduction; MXU ingests matching
    # dtypes (bf16 x bf16 -> f32 accumulate).  Pass stream_dtype=f32 for strict math.
    x_in = x.astype(stream_dtype)
    w1k = w1f.astype(x_in.dtype)

    const = lambda a: pl.BlockSpec(a.shape, lambda i: (0, 0))

    out = pl.pallas_call(
        _mlp_kernel,
        out_shape=jax.ShapeDtypeStruct((1, b_total), jnp.float32),
        grid=(num_tiles,),
        in_specs=[
            pl.BlockSpec((bt, F), lambda i: (i, 0)),     # x: streamed per batch tile
            const(w1k),                                  # weights: VMEM-resident
            const(b1f),
            const(w2),
            const(b2),
            const(w3t),
            const(b3),
        ],
        out_specs=pl.BlockSpec((1, bt), lambda i: (0, i)),   # lane-dense output row
        compiler_params=pltpu.CompilerParams(
            dimension_semantics=("parallel",),            # shard tiles over TCs (v7x)
            vmem_limit_bytes=32 * 1024 * 1024,            # safe on v5e/v6e/v7x
        ),
    )(x_in, w1k, b1f, w2, b2, w3t, b3)

    return out[0, :B].reshape(B, 1)


def init_params(key, n_input=N_INPUT, n_hidden=N_HIDDEN):
    """Deterministic init mirroring PyTorch shapes (Linear stored as [in, out])."""
    ks = jax.random.split(key, 8)

    def lin(kw, kb, fan_in, fan_out):
        bound = 1.0 / jnp.sqrt(float(fan_in))
        w = jax.random.uniform(kw, (fan_in, fan_out), jnp.float32, -bound, bound)
        b = jax.random.uniform(kb, (1, fan_out), jnp.float32, -bound, bound)
        return w, b

    gamma = jnp.ones((1, n_input), jnp.float32) \
        + 0.1 * jax.random.normal(ks[0], (1, n_input), jnp.float32)
    beta = 0.1 * jax.random.normal(ks[1], (1, n_input), jnp.float32)
    w1, b1 = lin(ks[2], ks[3], n_input, n_hidden)
    w2, b2 = lin(ks[4], ks[5], n_hidden, n_hidden)
    w3, b3 = lin(ks[6], ks[7], n_hidden, 1)
    return (gamma, beta, w1, b1, w2, b2, w3, b3)


def reference_forward(x, params):
    """Plain-JAX reference mirroring the PyTorch module (training-mode BN)."""
    gamma, beta, w1, b1, w2, b2, w3, b3 = params
    mean = jnp.mean(x, axis=0, keepdims=True)
    var = jnp.mean((x - mean) ** 2, axis=0, keepdims=True)
    h = (x - mean) / jnp.sqrt(var + BN_EPS) * gamma + beta
    h = jnp.maximum(h @ w1 + b1, 0.0)
    h = jnp.maximum(h @ w2 + b2, 0.0)
    return jax.nn.sigmoid(h @ w3 + b3)


if __name__ == "__main__":
    key = jax.random.PRNGKey(0)
    k_x, k_p = jax.random.split(key)
    params = init_params(k_p)

    # 1) Small batch, single full-array tile, strict f32 check.
    B = 8
    x = jax.random.normal(k_x, (B, N_INPUT), jnp.float32)
    out = jax.block_until_ready(neuron_forward(x, params, stream_dtype=jnp.float32))
    ref = reference_forward(x, params)
    assert out.shape == (B, 1)
    assert jnp.allclose(out, ref, atol=1e-4, rtol=1e-4), "mismatch vs reference (f32)"

    # 2) Ragged multi-tile batch (grid=3, edge block on the tail), f32, strict.
    B2 = 300
    x2 = jax.random.normal(jax.random.PRNGKey(1), (B2, N_INPUT), jnp.float32)
    out2 = jax.block_until_ready(
        neuron_forward(x2, params, block_b=128, stream_dtype=jnp.float32))
    ref2 = reference_forward(x2, params)
    assert out2.shape == (B2, 1)
    assert jnp.allclose(out2, ref2, atol=1e-4, rtol=1e-4), "mismatch vs reference (tiled)"

    # 3) Default bf16 streaming path (halves kernel-side HBM reads); looser tolerance.
    out3 = jax.block_until_ready(neuron_forward(x2, params, block_b=128))
    assert out3.shape == (B2, 1)
    assert float(jnp.max(jnp.abs(out3 - ref2))) < 3e-2, "bf16 stream mismatch"

    print("KERNEL_OK")
</pallas_src>

<mosaic_0001>
module attributes {stable_mosaic.version = 11 : i64} {
  func.func @_mlp_kernel(%arg0: i32, %arg1: memref<8x36xf32, #tpu.memory_space<vmem>>, %arg2: memref<36x32xf32, #tpu.memory_space<vmem>>, %arg3: memref<1x32xf32, #tpu.memory_space<vmem>>, %arg4: memref<32x32xf32, #tpu.memory_space<vmem>>, %arg5: memref<1x32xf32, #tpu.memory_space<vmem>>, %arg6: memref<1x32xf32, #tpu.memory_space<vmem>>, %arg7: memref<1x1xf32, #tpu.memory_space<vmem>>, %arg8: memref<1x8xf32, #tpu.memory_space<vmem>>) attributes {dimension_semantics = [#tpu.dimension_semantics<parallel>], iteration_bounds = array<i64: 1>, scalar_prefetch = 0 : i64, scratch_operands = 0 : i64, tpu.core_type = #tpu.core_type<tc>, window_params = [{transform_indices = @transform_0, window_bounds = array<i64: 8, 36>}, {pipeline_mode = #tpu.pipeline_mode<synchronous>, transform_indices = @transform_1, window_bounds = array<i64: 36, 32>}, {pipeline_mode = #tpu.pipeline_mode<synchronous>, transform_indices = @transform_2, window_bounds = array<i64: 1, 32>}, {pipeline_mode = #tpu.pipeline_mode<synchronous>, transform_indices = @transform_3, window_bounds = array<i64: 32, 32>}, {pipeline_mode = #tpu.pipeline_mode<synchronous>, transform_indices = @transform_4, window_bounds = array<i64: 1, 32>}, {pipeline_mode = #tpu.pipeline_mode<synchronous>, transform_indices = @transform_5, window_bounds = array<i64: 1, 32>}, {pipeline_mode = #tpu.pipeline_mode<synchronous>, transform_indices = @transform_6, window_bounds = array<i64: 1, 1>}, {transform_indices = @transform_7, window_bounds = array<i64: 1, 8>}]} {
    %c0 = arith.constant 0 : index
    %c0_0 = arith.constant 0 : index
    %0 = vector.load %arg1[%c0, %c0_0] : memref<8x36xf32, #tpu.memory_space<vmem>>, vector<8x36xf32>
    %c0_1 = arith.constant 0 : index
    %c0_2 = arith.constant 0 : index
    %1 = vector.load %arg2[%c0_1, %c0_2] : memref<36x32xf32, #tpu.memory_space<vmem>>, vector<36x32xf32>
    %cst = arith.constant dense<0.000000e+00> : vector<8x32xf32>
    %2 = tpu.matmul %0, %1, %cst {dimension_numbers = #tpu.dot_dimension_numbers<[1], [0], [0], [1], [0, 0, 1, 1], [], []>} : vector<8x36xf32>, vector<36x32xf32>, vector<8x32xf32> -> vector<8x32xf32>
    %c0_3 = arith.constant 0 : index
    %c0_4 = arith.constant 0 : index
    %3 = vector.load %arg3[%c0_3, %c0_4] : memref<1x32xf32, #tpu.memory_space<vmem>>, vector<1x32xf32>
    %4 = vector.broadcast %3 : vector<1x32xf32> to vector<8x32xf32>
    %5 = arith.addf %2, %4 : vector<8x32xf32>
    %cst_5 = arith.constant 0.000000e+00 : f32
    %6 = vector.broadcast %cst_5 : f32 to vector<8x32xf32>
    %7 = arith.maximumf %5, %6 : vector<8x32xf32>
    %c0_6 = arith.constant 0 : index
    %c0_7 = arith.constant 0 : index
    %8 = vector.load %arg4[%c0_6, %c0_7] : memref<32x32xf32, #tpu.memory_space<vmem>>, vector<32x32xf32>
    %cst_8 = arith.constant dense<0.000000e+00> : vector<8x32xf32>
    %9 = tpu.matmul %7, %8, %cst_8 {dimension_numbers = #tpu.dot_dimension_numbers<[1], [0], [0], [1], [0, 0, 1, 1], [], []>} : vector<8x32xf32>, vector<32x32xf32>, vector<8x32xf32> -> vector<8x32xf32>
    %c0_9 = arith.constant 0 : index
    %c0_10 = arith.constant 0 : index
    %10 = vector.load %arg5[%c0_9, %c0_10] : memref<1x32xf32, #tpu.memory_space<vmem>>, vector<1x32xf32>
    %11 = vector.broadcast %10 : vector<1x32xf32> to vector<8x32xf32>
    %12 = arith.addf %9, %11 : vector<8x32xf32>
    %cst_11 = arith.constant 0.000000e+00 : f32
    %13 = vector.broadcast %cst_11 : f32 to vector<8x32xf32>
    %14 = arith.maximumf %12, %13 : vector<8x32xf32>
    %c0_12 = arith.constant 0 : index
    %c0_13 = arith.constant 0 : index
    %15 = vector.load %arg6[%c0_12, %c0_13] : memref<1x32xf32, #tpu.memory_space<vmem>>, vector<1x32xf32>
    %16 = vector.broadcast %15 : vector<1x32xf32> to vector<8x32xf32>
    %17 = arith.mulf %14, %16 : vector<8x32xf32>
    %cst_14 = arith.constant dense<0.000000e+00> : vector<8xf32>
    %18 = vector.multi_reduction <add>, %17, %cst_14 [1] : vector<8x32xf32> to vector<8xf32>
    %19 = vector.shape_cast %18 : vector<8xf32> to vector<8x1xf32>
    %20 = tpu.transpose %19, [1, 0] : vector<8x1xf32> -> vector<1x8xf32>
    %c0_15 = arith.constant 0 : index
    %c0_16 = arith.constant 0 : index
    %21 = vector.load %arg7[%c0_15, %c0_16] : memref<1x1xf32, #tpu.memory_space<vmem>>, vector<1x1xf32>
    %22 = vector.broadcast %21 : vector<1x1xf32> to vector<1x8xf32>
    %23 = arith.addf %20, %22 : vector<1x8xf32>
    %24 = arith.negf %23 : vector<1x8xf32>
    %25 = math.exp %24 : vector<1x8xf32>
    %cst_17 = arith.constant 1.000000e+00 : f32
    %26 = vector.broadcast %cst_17 : f32 to vector<1x8xf32>
    %27 = arith.addf %26, %25 : vector<1x8xf32>
    %28 = arith.divf %26, %27 : vector<1x8xf32>
    %c0_18 = arith.constant 0 : index
    %c0_19 = arith.constant 0 : index
    %29 = vector.load %arg8[%c0_18, %c0_19] : memref<1x8xf32, #tpu.memory_space<vmem>>, vector<1x8xf32>
    tpu.vector_store %arg8[%c0_18, %c0_19], %28 {strides = array<i32>} : memref<1x8xf32, #tpu.memory_space<vmem>>, vector<1x8xf32>,
    return
  }
  func.func @transform_0(%arg0: i32) -> (i32, i32) {
    %c0_i32 = arith.constant 0 : i32
    %c0_i32_0 = arith.constant 0 : i32
    return %arg0, %c0_i32 : i32, i32
  }
  func.func @transform_1(%arg0: i32) -> (i32, i32) {
    %c0_i32 = arith.constant 0 : i32
    %c0_i32_0 = arith.constant 0 : i32
    %c0_i32_1 = arith.constant 0 : i32
    return %c0_i32, %c0_i32_0 : i32, i32
  }
  func.func @transform_2(%arg0: i32) -> (i32, i32) {
    %c0_i32 = arith.constant 0 : i32
    %c0_i32_0 = arith.constant 0 : i32
    %c0_i32_1 = arith.constant 0 : i32
    return %c0_i32, %c0_i32_0 : i32, i32
  }
  func.func @transform_3(%arg0: i32) -> (i32, i32) {
    %c0_i32 = arith.constant 0 : i32
    %c0_i32_0 = arith.constant 0 : i32
    %c0_i32_1 = arith.constant 0 : i32
    return %c0_i32, %c0_i32_0 : i32, i32
  }
  func.func @transform_4(%arg0: i32) -> (i32, i32) {
    %c0_i32 = arith.constant 0 : i32
    %c0_i32_0 = arith.constant 0 : i32
    %c0_i32_1 = arith.constant 0 : i32
    return %c0_i32, %c0_i32_0 : i32, i32
  }
  func.func @transform_5(%arg0: i32) -> (i32, i32) {
    %c0_i32 = arith.constant 0 : i32
    %c0_i32_0 = arith.constant 0 : i32
    %c0_i32_1 = arith.constant 0 : i32
    return %c0_i32, %c0_i32_0 : i32, i32
  }
  func.func @transform_6(%arg0: i32) -> (i32, i32) {
    %c0_i32 = arith.constant 0 : i32
    %c0_i32_0 = arith.constant 0 : i32
    %c0_i32_1 = arith.constant 0 : i32
    return %c0_i32, %c0_i32_0 : i32, i32
  }
  func.func @transform_7(%arg0: i32) -> (i32, i32) {
    %c0_i32 = arith.constant 0 : i32
    %c0_i32_0 = arith.constant 0 : i32
    return %c0_i32, %arg0 : i32, i32
  }
}

</mosaic_0001>

<llo_original>
// kernel: tpu_custom_call.1
$region0: #{tpu_custom_call.1}
  #allocation0 [shape = 'u32[]', space=smem, size = 0x4, offset = 0x4, fixed_abs, tag = 'smem constant byte address 0x4 - core index']
  #allocation1 [shape = 'u32[144,128]{1,0:T(1,128)}', space=vmem, size = 0x12000, scoped, tag = 'internal scratch']
  #allocation2 [shape = 'f32[1,1]{1,0:T(1,128)S(1)}', space=vmem, size = 0x200, scoped, tag = 'scoped memory for tpu_custom_call.1']
  %s0 = inlined_call_operand.vmem [shape: f32[8,36], index: 0, kind: input, shape index: {}]
  %s1 = inlined_call_operand.vmem [shape: f32[36,32], index: 1, kind: input, shape index: {}]
  %s2 = inlined_call_operand.vmem [shape: f32[1,32], index: 2, kind: input, shape index: {}]
  %s3 = inlined_call_operand.vmem [shape: f32[32,32], index: 3, kind: input, shape index: {}]
  %s4 = inlined_call_operand.vmem [shape: f32[1,32], index: 4, kind: input, shape index: {}]
  %s5 = inlined_call_operand.vmem [shape: f32[1,32], index: 5, kind: input, shape index: {}]
  %s6 = inlined_call_operand.<no memory space> [shape: f32[1,1], index: 6, kind: input, shape index: {}]
  %s7 = inlined_call_operand.hbm [shape: f32[1,8], index: 7, kind: output, shape index: {}]
  %s8 = sld [smem:[#allocation0]]
  $region38: #{tpu_custom_call.1} parent=0
    _
  %s10 = ssub.s32 1, %s8
  %s11 = scalar_select 0, %s10, %s8
  %v12 = vstv %s6
  %13 = vst [vmem:[#allocation2] sm:$0x1] %v12
  $region1: #{tpu_custom_call.1} parent=0
    #allocation3 [shape = 'u8[512]{0}', space=vmem, size = 0x400, scoped, tag = 'output window, operand 0, single buffered']
    #allocation4 [shape = 's32[1]{0}', space=sflag, size = 0x4, scoped, tag = 'scoped memory for tpu_custom_call.1']
    %14 = vsyncpa [#allocation4], 0
    // Predicated region
    $region2: #{tpu_custom_call.1} parent=1 // pred_check
      _
    $region3: #{tpu_custom_call.1} parent=1 // pred_check_branch
      %16 = sbr.rel (0) target = $region5
    $region4: #{tpu_custom_call.1} parent=1 // pred_region
      _
    $region5: #{tpu_custom_call.1} parent=1 // pred_fallthru
      _
    // Predicated region
    $region6: #{tpu_custom_call.1} parent=1 // pred_check
      _
    $region7: #{tpu_custom_call.1} parent=1 // pred_check_branch
      %18 = sbr.rel (0) target = $region9
    $region8: #{tpu_custom_call.1} parent=1 // pred_region
      _
    $region9: #{tpu_custom_call.1} parent=1 // pred_fallthru
      _
    // Predicated region
    $region10: #{tpu_custom_call.1} parent=1 // pred_check
      _
    $region11: #{tpu_custom_call.1} parent=1 // pred_check_branch
      %20 = sbr.rel (0) target = $region13
    $region12: #{tpu_custom_call.1} parent=1 // pred_region
      _
    $region13: #{tpu_custom_call.1} parent=1 // pred_fallthru
      _
    // Predicated region
    $region14: #{tpu_custom_call.1} parent=1 // pred_check
      _
    $region15: #{tpu_custom_call.1} parent=1 // pred_check_branch
      %22 = sbr.rel (0) target = $region17
    $region16: #{tpu_custom_call.1} parent=1 // pred_region
      _
    $region17: #{tpu_custom_call.1} parent=1 // pred_fallthru
      _
    // Predicated region
    $region18: #{tpu_custom_call.1} parent=1 // pred_check
      _
    $region19: #{tpu_custom_call.1} parent=1 // pred_check_branch
      %24 = sbr.rel (0) target = $region21
    $region20: #{tpu_custom_call.1} parent=1 // pred_region
      _
    $region21: #{tpu_custom_call.1} parent=1 // pred_fallthru
      _
    // Predicated region
    $region22: #{tpu_custom_call.1} parent=1 // pred_check
      _
    $region23: #{tpu_custom_call.1} parent=1 // pred_check_branch
      %26 = sbr.rel (0) target = $region25
    $region24: #{tpu_custom_call.1} parent=1 // pred_region
      _
    $region25: #{tpu_custom_call.1} parent=1 // pred_fallthru
      _
    // Predicated region
    $region26: #{tpu_custom_call.1} parent=1 // pred_check
      _
    $region27: #{tpu_custom_call.1} parent=1 // pred_check_branch
      %28 = sbr.rel (0) target = $region29
    $region28: #{tpu_custom_call.1} parent=1 // pred_region
      _
    $region29: #{tpu_custom_call.1} parent=1 // pred_fallthru
      _
    %v29 = vld [vmem:[%s0] sm:$0xff]
    %v30 = vld [vmem:[%s1] sm:$0xff]
    %v31 = vld [vmem:[%s1 + $0x8] sm:$0xff]
    %v32 = vld [vmem:[%s1 + $0x10] sm:$0xff]
    %v33 = vld [vmem:[%s1 + $0x18] sm:$0xff]
    %v34 = vld [vmem:[%s1 + $0x20] sm:$0xf]
    %v35 = vld [vmem:[%s2] sm:$0x1]
    %v37 = vlaneseq
    %v38 = vshrl.u32 %v37, 7
    %v39 = vsub.s32 0, %v38
    %v40 = vrot.slane %v35, %v39
    %vm42 = vcmask 293888
    %v44 = vsel %vm42, %v29, 0
    %vm46 = vcmask 1043456
    %v48 = vsel %vm46, %v34, 0
    %50 = vmatprep.subr.mxu0 0.0
    %51 = vmatpush1.msra.mxu0 %v30
    %52 = vmatprep.subr.mxu0 0.0
    %53 = vmatpush1.msra.mxu0 %v31
    %54 = vmatprep.subr.mxu0 0.0
    %55 = vmatpush1.msra.mxu0 %v32
    %56 = vmatprep.subr.mxu0 0.0
    %57 = vmatpush1.msra.mxu0 %v33
    %58 = vmatprep.subr.mxu0 0.0
    %59 = vmatpush1.msra.mxu0 %v48
    %60 = vmatprep.subr.mxu0 0.0
    %61 = vmatpush1.msra.mxu0 0.0
    %62 = vmatprep.subr.mxu0 0.0
    %63 = vmatpush1.msra.mxu0 0.0
    %64 = vmatprep.subr.mxu0 0.0
    %65 = vmatpush1.msra.mxu0 0.0
    %66 = vmatprep.subr.mxu0 0.0
    %67 = vmatpush1.msra.mxu0 0.0
    %68 = vmatprep.subr.mxu0 0.0
    %69 = vmatpush1.msra.mxu0 0.0
    %70 = vmatprep.subr.mxu0 0.0
    %71 = vmatpush1.msra.mxu0 0.0
    %72 = vmatprep.subr.mxu0 0.0
    %73 = vmatpush1.msra.mxu0 0.0
    %74 = vmatprep.subr.mxu0 0.0
    %75 = vmatpush1.msra.mxu0 0.0
    %76 = vmatprep.subr.mxu0 0.0
    %77 = vmatpush1.msra.mxu0 0.0
    %78 = vmatprep.subr.mxu0 0.0
    %79 = vmatpush1.msra.mxu0 0.0
    %80 = vmatprep.subr.mxu0 0.0
    %81 = vmatpush1.msra.mxu0 0.0
    %82 = vmatprep.subr.mxu0 0.0
    %83 = vmatpush1.msra.mxu0 0.0
    %84 = vmatprep.subr.mxu0 0.0
    %85 = vmatpush1.msra.mxu0 0.0
    %86 = vmatprep.subr.mxu0 0.0
    %87 = vmatpush1.msra.mxu0 0.0
    %88 = vmatprep.subr.mxu0 0.0
    %89 = vmatpush1.msra.mxu0 0.0
    %90 = vmatprep.subr.mxu0 0.0
    %91 = vmatpush1.msra.mxu0 0.0
    %92 = vmatprep.subr.mxu0 0.0
    %93 = vmatpush1.msra.mxu0 0.0
    %94 = vmatprep.subr.mxu0 0.0
    %95 = vmatpush1.msra.mxu0 0.0
    %96 = vmatprep.subr.mxu0 0.0
    %97 = vmatpush1.msra.mxu0 0.0
    %98 = vmatprep.subr.mxu0 0.0
    %99 = vmatpush1.msra.mxu0 0.0
    %100 = vmatprep.subr.mxu0 0.0
    %101 = vmatpush1.msra.mxu0 0.0
    %102 = vmatprep.subr.mxu0 0.0
    %103 = vmatpush1.msra.mxu0 0.0
    %104 = vmatprep.subr.mxu0 0.0
    %105 = vmatpush1.msra.mxu0 0.0
    %106 = vmatprep.subr.mxu0 0.0
    %107 = vmatpush1.msra.mxu0 0.0
    %108 = vmatprep.subr.mxu0 0.0
    %109 = vmatpush1.msra.mxu0 0.0
    %110 = vmatprep.subr.mxu0 0.0
    %111 = vmatpush1.msra.mxu0 0.0
    %112 = vmatprep.subr.mxu0 0.0
    %113 = vmatpush1.msra.mxu0 0.0
    %114 = vmatprep.mubr.f32.mxu0 0.0
    %115 = vmatmul.mubr.f32.gmra.mrb[0].mxu0 %v44
    %v116 = vpop.f32.mrb[0].mxu0
    %v117 = vadd.f32 %v40, %v116
    %v118 = vpop.f32.mrb[0].mxu0
    %119 = vdwg.mxu0
    %v120 = vmax.f32 %v117, 0.0
    %v121 = vld [vmem:[%s3] sm:$0xff]
    %v122 = vld [vmem:[%s3 + $0x8] sm:$0xff]
    %v123 = vld [vmem:[%s3 + $0x10] sm:$0xff]
    %v124 = vld [vmem:[%s3 + $0x18] sm:$0xff]
    %v125 = vld [vmem:[%s4] sm:$0x1]
    %v127 = vlaneseq
    %v128 = vshrl.u32 %v127, 7
    %v129 = vsub.s32 0, %v128
    %v130 = vrot.slane %v125, %v129
    %vm132 = vcmask 261120
    %v134 = vsel %vm132, %v120, 0
    %136 = vmatprep.subr.mxu0 0.0
    %137 = vmatpush1.msra.mxu0 %v121
    %138 = vmatprep.subr.mxu0 0.0
    %139 = vmatpush1.msra.mxu0 %v122
    %140 = vmatprep.subr.mxu0 0.0
    %141 = vmatpush1.msra.mxu0 %v123
    %142 = vmatprep.subr.mxu0 0.0
    %143 = vmatpush1.msra.mxu0 %v124
    %144 = vmatprep.subr.mxu0 0.0
    %145 = vmatpush1.msra.mxu0 0.0
    %146 = vmatprep.subr.mxu0 0.0
    %147 = vmatpush1.msra.mxu0 0.0
    %148 = vmatprep.subr.mxu0 0.0
    %149 = vmatpush1.msra.mxu0 0.0
    %150 = vmatprep.subr.mxu0 0.0
    %151 = vmatpush1.msra.mxu0 0.0
    %152 = vmatprep.subr.mxu0 0.0
    %153 = vmatpush1.msra.mxu0 0.0
    %154 = vmatprep.subr.mxu0 0.0
    %155 = vmatpush1.msra.mxu0 0.0
    %156 = vmatprep.subr.mxu0 0.0
    %157 = vmatpush1.msra.mxu0 0.0
    %158 = vmatprep.subr.mxu0 0.0
    %159 = vmatpush1.msra.mxu0 0.0
    %160 = vmatprep.subr.mxu0 0.0
    %161 = vmatpush1.msra.mxu0 0.0
    %162 = vmatprep.subr.mxu0 0.0
    %163 = vmatpush1.msra.mxu0 0.0
    %164 = vmatprep.subr.mxu0 0.0
    %165 = vmatpush1.msra.mxu0 0.0
    %166 = vmatprep.subr.mxu0 0.0
    %167 = vmatpush1.msra.mxu0 0.0
    %168 = vmatprep.subr.mxu0 0.0
    %169 = vmatpush1.msra.mxu0 0.0
    %170 = vmatprep.subr.mxu0 0.0
    %171 = vmatpush1.msra.mxu0 0.0
    %172 = vmatprep.subr.mxu0 0.0
    %173 = vmatpush1.msra.mxu0 0.0
    %174 = vmatprep.subr.mxu0 0.0
    %175 = vmatpush1.msra.mxu0 0.0
    %176 = vmatprep.subr.mxu0 0.0
    %177 = vmatpush1.msra.mxu0 0.0
    %178 = vmatprep.subr.mxu0 0.0
    %179 = vmatpush1.msra.mxu0 0.0
    %180 = vmatprep.subr.mxu0 0.0
    %181 = vmatpush1.msra.mxu0 0.0
    %182 = vmatprep.subr.mxu0 0.0
    %183 = vmatpush1.msra.mxu0 0.0
    %184 = vmatprep.subr.mxu0 0.0
    %185 = vmatpush1.msra.mxu0 0.0
    %186 = vmatprep.subr.mxu0 0.0
    %187 = vmatpush1.msra.mxu0 0.0
    %188 = vmatprep.subr.mxu0 0.0
    %189 = vmatpush1.msra.mxu0 0.0
    %190 = vmatprep.subr.mxu0 0.0
    %191 = vmatpush1.msra.mxu0 0.0
    %192 = vmatprep.subr.mxu0 0.0
    %193 = vmatpush1.msra.mxu0 0.0
    %194 = vmatprep.subr.mxu0 0.0
    %195 = vmatpush1.msra.mxu0 0.0
    %196 = vmatprep.subr.mxu0 0.0
    %197 = vmatpush1.msra.mxu0 0.0
    %198 = vmatprep.subr.mxu0 0.0
    %199 = vmatpush1.msra.mxu0 0.0
    %200 = vmatprep.mubr.f32.mxu0 0.0
    %201 = vmatmul.mubr.f32.gmra.mrb[0].mxu0 %v134
    %v202 = vpop.f32.mrb[0].mxu0
    %v203 = vadd.f32 %v130, %v202
    %v204 = vpop.f32.mrb[0].mxu0
    %205 = vdwg.mxu0
    %v206 = vmax.f32 %v203, 0.0
    %v207 = vld [vmem:[%s5] sm:$0x1]
    %v209 = vlaneseq
    %v210 = vshrl.u32 %v209, 7
    %v211 = vsub.s32 0, %v210
    %v212 = vrot.slane %v207, %v211
    %v214 = vmul.f32 %v206, %v212
    %v215 = vsel %vm132, %v214, 0.0
    %216 = vadd.xlane.f32.xlu0 %v215
    %v217 = vpop.xlane.xlu0 %216
    %218 = vxpose.xlu0.b32.start [1/16] %v217, 128
    %219 = vxpose.xlu0.b32.cont [2/16] 0.0, 128
    %220 = vxpose.xlu0.b32.cont [3/16] 0.0, 128
    %221 = vxpose.xlu0.b32.cont [4/16] 0.0, 128
    %222 = vxpose.xlu0.b32.cont [5/16] 0.0, 128
    %223 = vxpose.xlu0.b32.cont [6/16] 0.0, 128
    %224 = vxpose.xlu0.b32.cont [7/16] 0.0, 128
    %225 = vxpose.xlu0.b32.cont [8/16] 0.0, 128
    %226 = vxpose.xlu0.b32.cont [9/16] 0.0, 128
    %227 = vxpose.xlu0.b32.cont [10/16] 0.0, 128
    %228 = vxpose.xlu0.b32.cont [11/16] 0.0, 128
    %229 = vxpose.xlu0.b32.cont [12/16] 0.0, 128
    %230 = vxpose.xlu0.b32.cont [13/16] 0.0, 128
    %231 = vxpose.xlu0.b32.cont [14/16] 0.0, 128
    %232 = vxpose.xlu0.b32.cont [15/16] 0.0, 128
    %233 = vxpose.xlu0.b32.end [16/16] 0.0, 128
    %v234 = vpop.trf.xlu0
    %v235 = vpop.trf.xlu0
    %v236 = vpop.trf.xlu0
    %v237 = vpop.trf.xlu0
    %v238 = vpop.trf.xlu0
    %v239 = vpop.trf.xlu0
    %v240 = vpop.trf.xlu0
    %v241 = vpop.trf.xlu0
    %v242 = vpop.trf.xlu0
    %v243 = vpop.trf.xlu0
    %v244 = vpop.trf.xlu0
    %v245 = vpop.trf.xlu0
    %v246 = vpop.trf.xlu0
    %v247 = vpop.trf.xlu0
    %v248 = vpop.trf.xlu0
    %v249 = vpop.trf.xlu0
    %v250 = vld [vmem:[#allocation2] sm:$0x1]
    %252 = vset.pattern.permute.xlu0 0
    %253 = vperm.xlu0 %252, %v250
    %v254 = vpop.permute.xlu0 %253
    %v256 = vlaneseq
    %v257 = vshrl.u32 %v256, 7
    %v258 = vsub.s32 0, %v257
    %v259 = vrot.slane %v254, %v258
    %v260 = vadd.f32 %v234, %v259
    %v261 = vxor.u32 %v260, 2147483648
    %v262 = vmul.f32 %v261, 1.442695
    %v263 = vpow.pop %v262
    %v264 = vadd.f32 %v263, 1.0
    %v265 = vrcp.pop %v264
    %v266 = vmul.f32 1.0, %v265
    %vm267 = vcmask 57344
    %268 = vst.msk [vmem:[#allocation3] sm:$0x1] %vm267, %v266
    // Predicated region
    $region30: #{tpu_custom_call.1} parent=1 // pred_check
      _
    $region31: #{tpu_custom_call.1} parent=1 // pred_check_branch
      %270 = sbr.rel (0) target = $region33
    $region32: #{tpu_custom_call.1} parent=1 // pred_region
      %s272 = ssub.s32 16, 16
      %273 = vsyncadd [#allocation4], %s272
      %s275 = sshll.u32 [#allocation3], 4
      %s276 = int_to_ptr.vmem [resolvable:$true] %s275
      %278 = dma.vmem_to_hbm [thread:$0]  %s276, 16, %s7, [#allocation4]
    $region33: #{tpu_custom_call.1} parent=1 // pred_fallthru
      _
    // Predicated region
    $region34: #{tpu_custom_call.1} parent=1 // pred_check
      _
    $region35: #{tpu_custom_call.1} parent=1 // pred_check_branch
      %280 = sbr.rel (0) target = $region37
    $region36: #{tpu_custom_call.1} parent=1 // pred_region
      %281 = dma.done [#allocation4], 16
    $region37: #{tpu_custom_call.1} parent=1 // pred_fallthru
      _
    %282 = vsyncpa [#allocation4], 1

</llo_original>
